<compile_context>
chip_gen: v5e
topology: v5e:2x2
jax: 0.10.0
libtpu: 0.0.40
codegen_flags: <defaults>
</compile_context>

<pallas_src>
import functools

import jax
import jax.numpy as jnp
from jax import lax
from jax.experimental import pallas as pl
from jax.experimental.pallas import tpu as pltpu


def _round_up(n, m):
    return ((n + m - 1) // m) * m


def _device_kind():
    try:
        return jax.devices()[0].device_kind.lower()
    except Exception:
        return ""


def _has_bf16_vpu():
    kind = _device_kind()
    # v5e and older have no bf16 VALUs; keep elementwise math in f32 there.
    return not any(tag in kind for tag in ("v2", "v3", "v4", "v5"))


def _vmem_capacity_bytes():
    try:
        return int(pltpu.get_tpu_info().vmem_capacity_bytes)
    except Exception:
        return 64 * 1024 * 1024          # conservative (v7x-sized) fallback


def _resolve_elementwise_dtype(compute_dtype):
    cd = jnp.dtype(compute_dtype)
    if cd == jnp.dtype(jnp.float32) or not _has_bf16_vpu():
        return jnp.dtype(jnp.float32)
    return cd


def _default_tiling():
    """(block_n, vmem_limit_bytes) sized to the generation's physical VMEM."""
    cap = _vmem_capacity_bytes()
    if cap >= 96 * 1024 * 1024:          # v5e / v6e: 128 MiB per core
        return 8192, 64 * 1024 * 1024
    return 4096, 40 * 1024 * 1024        # v7x: 64 MiB per core


def _nre_loss_kernel(feat_ref, w_ref, b1_ref, w2_ref, b2_ref, out_ref, *,
                     n_rows, block_n, hidden):
    """One batch tile: partial sum of softplus(-z1) + softplus(z0).

    feat_ref : (TN, 2D+L)  packed [theta | theta' | x]           (bf16/f32)
    w_ref    : (2D+L, 2H)  fused [[W1t,0],[0,W1t],[W1x,W1x]]     (bf16/f32)
    b1_ref   : (1, 2H) f32,  w2_ref: (1, 2H) ew-dtype,  b2_ref: (1, 1) f32
    out_ref  : (1, 1, 1) f32  per-tile partial sum
    """
    i = pl.program_id(0)

    # One MXU pass produces both pre-activations: lanes [:H] are the joint
    # pair (theta_i, x_i), lanes [H:] are the product pair (theta_{i-1}, x_i).
    pre = jnp.dot(feat_ref[...], w_ref[...],
                  preferred_element_type=jnp.float32)             # (TN, 2H) f32
    h = jnp.maximum(pre + b1_ref[...], 0.0)                       # f32 bias+relu
    hw = h.astype(w2_ref.dtype) * w2_ref[...]                     # VPU (bf16 on v6e/v7x)

    # Thin H->1 projections as f32 lane reductions; the MXU stays free.
    z1 = jnp.sum(hw[:, :hidden].astype(jnp.float32), axis=-1,
                 keepdims=True) + b2_ref[...]                     # (TN, 1) joint
    z0 = jnp.sum(hw[:, hidden:].astype(jnp.float32), axis=-1,
                 keepdims=True) + b2_ref[...]                     # (TN, 1) product

    # Mask padded rows of a ragged last tile *before* softplus so garbage in
    # the over-read block can never produce Inf/NaN.
    row = i * block_n + lax.broadcasted_iota(jnp.int32, z1.shape, 0)
    valid = row < n_rows
    z1 = jnp.where(valid, z1, 0.0)
    z0 = jnp.where(valid, z0, 0.0)

    def softplus(t):            # -logsigmoid(-t); numerically stable, f32
        return jnp.maximum(t, 0.0) + jnp.log1p(jnp.exp(-jnp.abs(t)))

    per_row = jnp.where(valid, softplus(-z1) + softplus(z0), 0.0)
    out_ref[...] = jnp.sum(per_row, axis=0, keepdims=True).reshape(1, 1, 1)


def nre_loss(theta, x, w1, b1, w2, b2, *, block_n=None,
             compute_dtype=jnp.bfloat16, elementwise_dtype=None,
             vmem_limit_bytes=None):
    """theta: (N, D), x: (N, L), w1: (D+L, H), b1: (1, H), w2: (H, 1), b2: (1, 1)."""
    N, D = theta.shape
    L = x.shape[-1]
    H = w1.shape[-1]

    cd = jnp.dtype(compute_dtype)
    ed = (jnp.dtype(elementwise_dtype) if elementwise_dtype is not None
          else _resolve_elementwise_dtype(cd))

    default_bn, default_vmem = _default_tiling()
    if block_n is None:
        block_n = default_bn
    if vmem_limit_bytes is None:
        vmem_limit_bytes = default_vmem

    # Single fused wrapper op: roll + concat + cast -> packed (N, 2D+L) stream.
    packed = jnp.concatenate(
        [theta, jnp.roll(theta, 1, axis=0), x], axis=-1).astype(cd)

    # Block-structured RHS so ONE matmul covers both logits and the shared x
    # projection:  [theta | theta' | x] @ [[W1t, 0], [0, W1t], [W1x, W1x]].
    w1t = w1[:D, :]
    w1x = w1[D:, :]
    zdh = jnp.zeros((D, H), w1.dtype)
    w_fused = jnp.concatenate(
        [jnp.concatenate([w1t, zdh], axis=1),
         jnp.concatenate([zdh, w1t], axis=1),
         jnp.concatenate([w1x, w1x], axis=1)], axis=0).astype(cd)   # (2D+L, 2H)

    b1_fused = jnp.tile(b1.reshape(1, H), (1, 2)).astype(jnp.float32)  # (1, 2H)
    w2_fused = jnp.tile(w2.reshape(1, H), (1, 2)).astype(ed)           # (1, 2H)
    b2f = b2.reshape(1, 1).astype(jnp.float32)

    # Batch tile: multiple of 8 sublanes (16 for sub-32-bit matmul operands).
    row_align = 8 if cd.itemsize >= 4 else 16
    tn = min(_round_up(block_n, row_align), _round_up(N, row_align))
    grid = (pl.cdiv(N, tn),)
    din = 2 * D + L

    feat_spec = pl.BlockSpec((tn, din), lambda i: (i, 0))
    # Weights/biases: constant index_map -> DMA'd once, resident in VMEM.
    # (They total ~14 KiB here, so default double-buffering of the resident
    #  specs is noise; pl.Buffered(1) hygiene intentionally omitted.)
    resident = lambda shape: pl.BlockSpec(shape, lambda i: (0, 0))

    kernel = functools.partial(_nre_loss_kernel, n_rows=N, block_n=tn, hidden=H)

    partials = pl.pallas_call(
        kernel,
        out_shape=jax.ShapeDtypeStruct((grid[0], 1, 1), jnp.float32),
        grid_spec=pltpu.PrefetchScalarGridSpec(
            num_scalar_prefetch=0,
            grid=grid,
            in_specs=[
                feat_spec,                # packed [theta | theta' | x]
                resident((din, 2 * H)),   # fused W1 block matrix
                resident((1, 2 * H)),     # b1 tiled
                resident((1, 2 * H)),     # w2 tiled (row)
                resident((1, 1)),         # b2
            ],
            out_specs=pl.BlockSpec((1, 1, 1), lambda i: (i, 0, 0)),
        ),
        compiler_params=pltpu.CompilerParams(
            # Per-tile partial sums -> no carried state, so the batch axis is
            # 'parallel' (lets v7x's two TensorCores split the grid).
            dimension_semantics=("parallel",),
            vmem_limit_bytes=vmem_limit_bytes,
        ),
    )(packed, w_fused, b1_fused, w2_fused, b2f)

    # Cross-tile reduction (numerically tighter than one running scalar).
    return jnp.sum(partials) * (1.0 / N)


def _reference(theta, x, w1, b1, w2, b2, compute_dtype=jnp.float32,
               elementwise_dtype=jnp.float32):
    """Pure-JAX reference with matching matmul / elementwise dtypes."""
    cd = jnp.dtype(compute_dtype)
    ed = jnp.dtype(elementwise_dtype)
    theta_p = jnp.roll(theta, 1, axis=0)

    def d_phi(t):
        f = jnp.concatenate([t, x], axis=-1).astype(cd)
        h = jnp.dot(f, w1.astype(cd), preferred_element_type=jnp.float32)
        h = jnp.maximum(h + b1, 0.0)
        hw = (h.astype(ed) * w2[:, 0].astype(ed)).astype(jnp.float32)
        return jnp.sum(hw, axis=-1) + b2[0, 0]

    log_r = d_phi(theta)
    log_r_p = d_phi(theta_p)
    return (-jnp.mean(jax.nn.log_sigmoid(log_r))
            - jnp.mean(jax.nn.log_sigmoid(-log_r_p)))


if __name__ == "__main__":
    D, L, H = 4, 16, 128          # theta dim, obs dim, hidden dim (lane-dense)
    DIN = D + L

    key = jax.random.PRNGKey(0)
    k_w1, k_b1, k_w2, k_b2, k_data = jax.random.split(key, 5)

    # Deterministic synthetic parameters (not a checkpoint).
    w1 = jax.random.normal(k_w1, (DIN, H), jnp.float32) * (1.0 / jnp.sqrt(DIN))
    b1 = jax.random.normal(k_b1, (1, H), jnp.float32) * 0.01
    w2 = jax.random.normal(k_w2, (H, 1), jnp.float32) * (1.0 / jnp.sqrt(H))
    b2 = jax.random.normal(k_b2, (1, 1), jnp.float32) * 0.01

    cases = [
        (8, jnp.bfloat16, 5e-3),    # bf16 matmul operands, exact tile
        (13, jnp.bfloat16, 5e-3),   # bf16 + ragged last tile (masked, true-N mean)
        (8, jnp.float32, 2e-2),     # f32 operand path (loose: MXU f32 variance)
    ]
    for n, cd, tol in cases:
        kt, kx = jax.random.split(jax.random.fold_in(k_data, n))
        theta = jax.random.normal(kt, (n, D), jnp.float32)
        x = jax.random.normal(kx, (n, L), jnp.float32)

        ed = _resolve_elementwise_dtype(cd)
        loss = jax.block_until_ready(
            nre_loss(theta, x, w1, b1, w2, b2, compute_dtype=cd))
        ref = jax.block_until_ready(
            _reference(theta, x, w1, b1, w2, b2, compute_dtype=cd,
                       elementwise_dtype=ed))
        assert jnp.isfinite(loss), (n, cd, loss)
        assert jnp.allclose(loss, ref, rtol=tol, atol=tol), (n, cd, loss, ref)

    print("KERNEL_OK")
</pallas_src>

<mosaic_0001>
module attributes {stable_mosaic.version = 11 : i64} {
  func.func @_nre_loss_kernel(%arg0: i32, %arg1: memref<16x24xbf16, #tpu.memory_space<vmem>>, %arg2: memref<24x256xbf16, #tpu.memory_space<vmem>>, %arg3: memref<1x256xf32, #tpu.memory_space<vmem>>, %arg4: memref<1x256xbf16, #tpu.memory_space<vmem>>, %arg5: memref<1x1xf32, #tpu.memory_space<vmem>>, %arg6: memref<1x1x1xf32, #tpu.memory_space<vmem>>) attributes {dimension_semantics = [#tpu.dimension_semantics<parallel>], iteration_bounds = array<i64: 1>, scalar_prefetch = 0 : i64, scratch_operands = 0 : i64, tpu.core_type = #tpu.core_type<tc>, window_params = [{transform_indices = @transform_0, window_bounds = array<i64: 16, 24>}, {pipeline_mode = #tpu.pipeline_mode<synchronous>, transform_indices = @transform_1, window_bounds = array<i64: 24, 256>}, {pipeline_mode = #tpu.pipeline_mode<synchronous>, transform_indices = @transform_2, window_bounds = array<i64: 1, 256>}, {pipeline_mode = #tpu.pipeline_mode<synchronous>, transform_indices = @transform_3, window_bounds = array<i64: 1, 256>}, {pipeline_mode = #tpu.pipeline_mode<synchronous>, transform_indices = @transform_4, window_bounds = array<i64: 1, 1>}, {transform_indices = @transform_5, window_bounds = array<i64: 1, 1, 1>}]} {
    %c0 = arith.constant 0 : index
    %c0_0 = arith.constant 0 : index
    %0 = vector.load %arg1[%c0, %c0_0] : memref<16x24xbf16, #tpu.memory_space<vmem>>, vector<16x24xbf16>
    %c0_1 = arith.constant 0 : index
    %c0_2 = arith.constant 0 : index
    %1 = vector.load %arg2[%c0_1, %c0_2] : memref<24x256xbf16, #tpu.memory_space<vmem>>, vector<24x256xbf16>
    %cst = arith.constant dense<0.000000e+00> : vector<16x256xf32>
    %2 = tpu.matmul %0, %1, %cst {dimension_numbers = #tpu.dot_dimension_numbers<[1], [0], [0], [1], [0, 0, 1, 1], [], []>} : vector<16x24xbf16>, vector<24x256xbf16>, vector<16x256xf32> -> vector<16x256xf32>
    %c0_3 = arith.constant 0 : index
    %c0_4 = arith.constant 0 : index
    %3 = vector.load %arg3[%c0_3, %c0_4] : memref<1x256xf32, #tpu.memory_space<vmem>>, vector<1x256xf32>
    %4 = vector.broadcast %3 : vector<1x256xf32> to vector<16x256xf32>
    %5 = arith.addf %2, %4 : vector<16x256xf32>
    %cst_5 = arith.constant 0.000000e+00 : f32
    %6 = vector.broadcast %cst_5 : f32 to vector<16x256xf32>
    %7 = arith.maximumf %5, %6 : vector<16x256xf32>
    %8 = arith.truncf %7 : vector<16x256xf32> to vector<16x256xbf16>
    %c0_6 = arith.constant 0 : index
    %c0_7 = arith.constant 0 : index
    %9 = vector.load %arg4[%c0_6, %c0_7] : memref<1x256xbf16, #tpu.memory_space<vmem>>, vector<1x256xbf16>
    %10 = vector.broadcast %9 : vector<1x256xbf16> to vector<16x256xbf16>
    %11 = arith.mulf %8, %10 : vector<16x256xbf16>
    %12 = vector.extract_strided_slice %11 {offsets = [0, 0], sizes = [16, 128], strides = [1, 1]} : vector<16x256xbf16> to vector<16x128xbf16>
    %13 = arith.extf %12 : vector<16x128xbf16> to vector<16x128xf32>
    %cst_8 = arith.constant dense<0.000000e+00> : vector<16xf32>
    %14 = vector.multi_reduction <add>, %13, %cst_8 [1] : vector<16x128xf32> to vector<16xf32>
    %15 = vector.shape_cast %14 : vector<16xf32> to vector<16x1xf32>
    %c0_9 = arith.constant 0 : index
    %c0_10 = arith.constant 0 : index
    %16 = vector.load %arg5[%c0_9, %c0_10] : memref<1x1xf32, #tpu.memory_space<vmem>>, vector<1x1xf32>
    %17 = vector.broadcast %16 : vector<1x1xf32> to vector<16x1xf32>
    %18 = arith.addf %15, %17 : vector<16x1xf32>
    %19 = vector.extract_strided_slice %11 {offsets = [0, 128], sizes = [16, 128], strides = [1, 1]} : vector<16x256xbf16> to vector<16x128xbf16>
    %20 = arith.extf %19 : vector<16x128xbf16> to vector<16x128xf32>
    %cst_11 = arith.constant dense<0.000000e+00> : vector<16xf32>
    %21 = vector.multi_reduction <add>, %20, %cst_11 [1] : vector<16x128xf32> to vector<16xf32>
    %22 = vector.shape_cast %21 : vector<16xf32> to vector<16x1xf32>
    %c0_12 = arith.constant 0 : index
    %c0_13 = arith.constant 0 : index
    %23 = vector.load %arg5[%c0_12, %c0_13] : memref<1x1xf32, #tpu.memory_space<vmem>>, vector<1x1xf32>
    %24 = vector.broadcast %23 : vector<1x1xf32> to vector<16x1xf32>
    %25 = arith.addf %22, %24 : vector<16x1xf32>
    %c16_i32 = arith.constant 16 : i32
    %26 = arith.muli %arg0, %c16_i32 : i32
    %27 = tpu.iota {dimensions = array<i32: 0>} : vector<16x1xi32>
    %28 = vector.broadcast %26 : i32 to vector<16x1xi32>
    %29 = arith.addi %28, %27 : vector<16x1xi32>
    %c8_i32 = arith.constant 8 : i32
    %30 = vector.broadcast %c8_i32 : i32 to vector<16x1xi32>
    %31 = arith.cmpi slt, %29, %30 : vector<16x1xi32>
    %cst_14 = arith.constant 0.000000e+00 : f32
    %32 = vector.broadcast %cst_14 : f32 to vector<16x1xf32>
    %33 = arith.select %31, %18, %32 : vector<16x1xi1>, vector<16x1xf32>
    %cst_15 = arith.constant 0.000000e+00 : f32
    %34 = vector.broadcast %cst_15 : f32 to vector<16x1xf32>
    %35 = arith.select %31, %25, %34 : vector<16x1xi1>, vector<16x1xf32>
    %cst_16 = arith.constant 0.000000e+00 : f32
    %36 = vector.broadcast %cst_16 : f32 to vector<16x1xf32>
    %37 = arith.subf %36, %33 : vector<16x1xf32>
    %cst_17 = arith.constant 0.000000e+00 : f32
    %38 = vector.broadcast %cst_17 : f32 to vector<16x1xf32>
    %39 = arith.maximumf %37, %38 : vector<16x1xf32>
    %40 = math.absf %37 : vector<16x1xf32>
    %cst_18 = arith.constant 0.000000e+00 : f32
    %41 = vector.broadcast %cst_18 : f32 to vector<16x1xf32>
    %42 = arith.subf %41, %40 : vector<16x1xf32>
    %43 = math.exp %42 : vector<16x1xf32>
    %44 = math.log1p %43 : vector<16x1xf32>
    %45 = arith.addf %39, %44 : vector<16x1xf32>
    %cst_19 = arith.constant 0.000000e+00 : f32
    %46 = vector.broadcast %cst_19 : f32 to vector<16x1xf32>
    %47 = arith.maximumf %35, %46 : vector<16x1xf32>
    %48 = math.absf %35 : vector<16x1xf32>
    %cst_20 = arith.constant 0.000000e+00 : f32
    %49 = vector.broadcast %cst_20 : f32 to vector<16x1xf32>
    %50 = arith.subf %49, %48 : vector<16x1xf32>
    %51 = math.exp %50 : vector<16x1xf32>
    %52 = math.log1p %51 : vector<16x1xf32>
    %53 = arith.addf %47, %52 : vector<16x1xf32>
    %54 = arith.addf %45, %53 : vector<16x1xf32>
    %cst_21 = arith.constant 0.000000e+00 : f32
    %55 = vector.broadcast %cst_21 : f32 to vector<16x1xf32>
    %56 = arith.select %31, %54, %55 : vector<16x1xi1>, vector<16x1xf32>
    %cst_22 = arith.constant dense<0.000000e+00> : vector<1xf32>
    %57 = vector.multi_reduction <add>, %56, %cst_22 [0] : vector<16x1xf32> to vector<1xf32>
    %58 = vector.shape_cast %57 : vector<1xf32> to vector<1x1xf32>
    %59 = vector.shape_cast %58 : vector<1x1xf32> to vector<1x1x1xf32>
    %c0_23 = arith.constant 0 : index
    %c0_24 = arith.constant 0 : index
    %c0_25 = arith.constant 0 : index
    %60 = vector.load %arg6[%c0_23, %c0_24, %c0_25] : memref<1x1x1xf32, #tpu.memory_space<vmem>>, vector<1x1x1xf32>
    tpu.vector_store %arg6[%c0_23, %c0_24, %c0_25], %59 {strides = array<i32>} : memref<1x1x1xf32, #tpu.memory_space<vmem>>, vector<1x1x1xf32>,
    return
  }
  func.func @transform_0(%arg0: i32) -> (i32, i32) {
    %c0_i32 = arith.constant 0 : i32
    %c0_i32_0 = arith.constant 0 : i32
    return %arg0, %c0_i32 : i32, i32
  }
  func.func @transform_1(%arg0: i32) -> (i32, i32) {
    %c0_i32 = arith.constant 0 : i32
    %c0_i32_0 = arith.constant 0 : i32
    %c0_i32_1 = arith.constant 0 : i32
    return %c0_i32, %c0_i32_0 : i32, i32
  }
  func.func @transform_2(%arg0: i32) -> (i32, i32) {
    %c0_i32 = arith.constant 0 : i32
    %c0_i32_0 = arith.constant 0 : i32
    %c0_i32_1 = arith.constant 0 : i32
    return %c0_i32, %c0_i32_0 : i32, i32
  }
  func.func @transform_3(%arg0: i32) -> (i32, i32) {
    %c0_i32 = arith.constant 0 : i32
    %c0_i32_0 = arith.constant 0 : i32
    %c0_i32_1 = arith.constant 0 : i32
    return %c0_i32, %c0_i32_0 : i32, i32
  }
  func.func @transform_4(%arg0: i32) -> (i32, i32) {
    %c0_i32 = arith.constant 0 : i32
    %c0_i32_0 = arith.constant 0 : i32
    %c0_i32_1 = arith.constant 0 : i32
    return %c0_i32, %c0_i32_0 : i32, i32
  }
  func.func @transform_5(%arg0: i32) -> (i32, i32, i32) {
    %c0_i32 = arith.constant 0 : i32
    %c0_i32_0 = arith.constant 0 : i32
    %c0_i32_1 = arith.constant 0 : i32
    return %arg0, %c0_i32, %c0_i32_0 : i32, i32, i32
  }
}

</mosaic_0001>

<llo_original>
// kernel: tpu_custom_call.1
$region0: #{tpu_custom_call.1}
  #allocation0 [shape = 'u32[]', space=smem, size = 0x4, offset = 0x4, fixed_abs, tag = 'smem constant byte address 0x4 - core index']
  #allocation1 [shape = 'u32[72,128]{1,0:T(1,128)}', space=vmem, size = 0x9000, scoped, tag = 'internal scratch']
  #allocation2 [shape = 'f32[1,1]{1,0:T(1,128)S(1)}', space=vmem, size = 0x200, scoped, tag = 'scoped memory for tpu_custom_call.1']
  %s0 = inlined_call_operand.hbm [shape: bf16[8,24], index: 0, kind: input, shape index: {}]
  %s1 = inlined_call_operand.hbm [shape: bf16[24,256], index: 1, kind: input, shape index: {}]
  %s2 = inlined_call_operand.vmem [shape: f32[1,256], index: 2, kind: input, shape index: {}]
  %s3 = inlined_call_operand.vmem [shape: bf16[1,256], index: 3, kind: input, shape index: {}]
  %s4 = inlined_call_operand.<no memory space> [shape: f32[1,1], index: 4, kind: input, shape index: {}]
  %s5 = inlined_call_operand.hbm [shape: f32[1,1,1], index: 5, kind: output, shape index: {}]
  %s6 = sld [smem:[#allocation0]]
  $region38: #{tpu_custom_call.1} parent=0
    _
  %s8 = ssub.s32 1, %s6
  %s9 = scalar_select 0, %s8, %s6
  %v10 = vstv %s4
  %11 = vst [vmem:[#allocation2] sm:$0x1] %v10
  $region1: #{tpu_custom_call.1} parent=0
    #allocation3 [shape = 'u8[4096]{0}', space=vmem, size = 0x1000, scoped, tag = 'input window, operand 0, single buffered']
    #allocation4 [shape = 's32[1]{0}', space=sflag, size = 0x4, scoped, tag = 'scoped memory for tpu_custom_call.1']
    #allocation5 [shape = 's32[1]{0}', space=sflag, size = 0x4, scoped, tag = 'scoped memory for tpu_custom_call.1']
    #allocation6 [shape = 'u8[12288]{0}', space=vmem, size = 0x3000, scoped, tag = 'input window, operand 1, single buffered']
    #allocation7 [shape = 's32[1]{0}', space=sflag, size = 0x4, scoped, tag = 'scoped memory for tpu_custom_call.1']
    #allocation8 [shape = 'u8[512]{0}', space=vmem, size = 0x400, scoped, tag = 'output window, operand 0, single buffered']
    %12 = vsyncpa [#allocation4], 0
    %13 = vsyncpa [#allocation7], 0
    %14 = vsyncpa [#allocation5], 0
    // Predicated region
    $region2: #{tpu_custom_call.1} parent=1 // pred_check
      _
    $region3: #{tpu_custom_call.1} parent=1 // pred_check_branch
      %16 = sbr.rel (0) target = $region5
    $region4: #{tpu_custom_call.1} parent=1 // pred_region
      %18 = vsyncadd [#allocation4], 64
      %s19 = sshll.u32 %s0, 4
      %s20 = int_to_ptr.hbm [resolvable:$true] %s19
      %s21 = sshll.u32 [#allocation3], 4
      %s22 = int_to_ptr.vmem [resolvable:$true] %s21
      %27 = dma.hbm_to_vmem [thread:$0]  %s20, 64, %s22, [#allocation4], 64, 64, 4
    $region5: #{tpu_custom_call.1} parent=1 // pred_fallthru
      _
    // Predicated region
    $region6: #{tpu_custom_call.1} parent=1 // pred_check
      _
    $region7: #{tpu_custom_call.1} parent=1 // pred_check_branch
      %29 = sbr.rel (0) target = $region9
    $region8: #{tpu_custom_call.1} parent=1 // pred_region
      %31 = vsyncadd [#allocation7], 0
      %s32 = sshll.u32 %s1, 4
      %s33 = int_to_ptr.hbm [resolvable:$true] %s32
      %s34 = sshll.u32 [#allocation6], 4
      %s35 = int_to_ptr.vmem [resolvable:$true] %s34
      %40 = dma.hbm_to_vmem [thread:$0]  %s33, 384, %s35, [#allocation7], 128, 128, 8
    $region9: #{tpu_custom_call.1} parent=1 // pred_fallthru
      _
    // Predicated region
    $region10: #{tpu_custom_call.1} parent=1 // pred_check
      _
    $region11: #{tpu_custom_call.1} parent=1 // pred_check_branch
      %42 = sbr.rel (0) target = $region13
    $region12: #{tpu_custom_call.1} parent=1 // pred_region
      _
    $region13: #{tpu_custom_call.1} parent=1 // pred_fallthru
      _
    // Predicated region
    $region14: #{tpu_custom_call.1} parent=1 // pred_check
      _
    $region15: #{tpu_custom_call.1} parent=1 // pred_check_branch
      %44 = sbr.rel (0) target = $region17
    $region16: #{tpu_custom_call.1} parent=1 // pred_region
      _
    $region17: #{tpu_custom_call.1} parent=1 // pred_fallthru
      _
    // Predicated region
    $region18: #{tpu_custom_call.1} parent=1 // pred_check
      _
    $region19: #{tpu_custom_call.1} parent=1 // pred_check_branch
      %46 = sbr.rel (0) target = $region21
    $region20: #{tpu_custom_call.1} parent=1 // pred_region
      _
    $region21: #{tpu_custom_call.1} parent=1 // pred_fallthru
      _
    // Predicated region
    $region22: #{tpu_custom_call.1} parent=1 // pred_check
      _
    $region23: #{tpu_custom_call.1} parent=1 // pred_check_branch
      %48 = sbr.rel (0) target = $region25
    $region24: #{tpu_custom_call.1} parent=1 // pred_region
      %50 = dma.done [#allocation4], 128
    $region25: #{tpu_custom_call.1} parent=1 // pred_fallthru
      _
    // Predicated region
    $region26: #{tpu_custom_call.1} parent=1 // pred_check
      _
    $region27: #{tpu_custom_call.1} parent=1 // pred_check_branch
      %52 = sbr.rel (0) target = $region29
    $region28: #{tpu_custom_call.1} parent=1 // pred_region
      %54 = dma.done [#allocation7], 384
    $region29: #{tpu_custom_call.1} parent=1 // pred_fallthru
      _
    %v56 = vld [vmem:[#allocation3] sm:$0xf]
    %v57 = vld [vmem:[#allocation3 + $0x4] sm:$0xf]
    %v58 = vld [vmem:[#allocation6] sm:$0xff]
    %v59 = vld [vmem:[#allocation6 + $0x8] sm:$0xff]
    %v60 = vld [vmem:[#allocation6 + $0x10] sm:$0xff]
    %v61 = vld [vmem:[%s2] sm:$0x3]
    %v63 = vperm.slane %v61, 0
    %v64 = vperm.slane %v61, 1
    %v69 = vunpack.c.l.b16 %v56
    %v70 = vunpack.c.l.b16 %v57
    %v71 = vpack.c.b16 %v70, %v69
    %v75 = vunpack.c.l.b16 %v58
    %v76 = vunpack.c.h.b16 %v58
    %v77 = vunpack.c.l.b16 %v59
    %v78 = vunpack.c.h.b16 %v59
    %v79 = vunpack.c.l.b16 %v60
    %v80 = vunpack.c.h.b16 %v60
    %v81 = vpack.c.b16 %v77, %v75
    %v82 = vpack.c.b16 %v78, %v76
    %v83 = vpack.c.b16 %v79, %v79
    %v84 = vpack.c.b16 %v80, %v80
    %vm87 = vcmask 195584
    %v89 = vsel %vm87, %v71, 0
    %vm91 = vcmask 1043456
    %v93 = vsel %vm91, %v83, 0
    %v96 = vsel %vm91, %v84, 0
    %98 = vmatpush.bf16.msra.mxu0 0
    %99 = vmatpush.bf16.msra.mxu0 0
    %100 = vmatpush.bf16.msra.mxu0 0
    %101 = vmatpush.bf16.msra.mxu0 0
    %102 = vmatpush.bf16.msra.mxu0 0
    %103 = vmatpush.bf16.msra.mxu0 0
    %104 = vmatpush.bf16.msra.mxu0 %v93
    %105 = vmatpush.bf16.msra.mxu0 %v81
    %106 = vmatmul.bf16.gmra.mxu0 %v89
    %v107 = vpop.f32.mrf.mxu0
    %v108 = vadd.f32 %v63, %v107
    %v109 = vpop.f32.mrf.mxu0
    %v110 = vadd.f32 %v63, %v109
    %111 = vdwg.mxu0
    %112 = vmatpush.bf16.msra.mxu0 0
    %113 = vmatpush.bf16.msra.mxu0 0
    %114 = vmatpush.bf16.msra.mxu0 0
    %115 = vmatpush.bf16.msra.mxu0 0
    %116 = vmatpush.bf16.msra.mxu0 0
    %117 = vmatpush.bf16.msra.mxu0 0
    %118 = vmatpush.bf16.msra.mxu0 %v96
    %119 = vmatpush.bf16.msra.mxu0 %v82
    %120 = vmatmul.bf16.gmra.mxu0 %v89
    %v121 = vpop.f32.mrf.mxu0
    %v122 = vadd.f32 %v64, %v121
    %v123 = vpop.f32.mrf.mxu0
    %v124 = vadd.f32 %v64, %v123
    %125 = vdwg.mxu0
    %v126 = vmax.f32 %v108, 0.0
    %v127 = vmax.f32 %v122, 0.0
    %v128 = vmax.f32 %v110, 0.0
    %v129 = vmax.f32 %v124, 0.0
    %v130 = vpack.c.bf16 %v127, %v126
    %v131 = vpack.c.bf16 %v129, %v128
    %v132 = vld [vmem:[%s3] sm:$0x3]
    %134 = vst [vmem:[#allocation1] ss:$9 sm:$0xff] %v132
    %v135 = vld [vmem:[#allocation1] sm:$0xff]
    %v136 = vld [vmem:[#allocation1 + $0x9] sm:$0xff]
    %v137 = vpack.i.b16 %v135, %v135
    %v139 = vperm.slane %v137, 0
    %v140 = vpack.i.b16 %v136, %v136
    %v142 = vperm.slane %v140, 0
    %v143 = vunpack.c.l.bf16 %v130
    %v144 = vunpack.c.h.bf16 %v130
    %v145 = vunpack.c.l.bf16 %v131
    %v146 = vunpack.c.h.bf16 %v131
    %v147 = vunpack.c.l.bf16 %v139
    %v148 = vunpack.c.l.bf16 %v142
    %v149 = vmul.f32 %v143, %v147
    %v150 = vmul.f32 %v144, %v148
    %v151 = vmul.f32 %v145, %v147
    %v152 = vmul.f32 %v146, %v148
    %v153 = vpack.c.bf16 %v150, %v149
    %v154 = vpack.c.bf16 %v152, %v151
    %v155 = vunpack.c.l.bf16 %v153
    %v156 = vunpack.c.l.bf16 %v154
    %157 = vadd.xlane.f32.xlu0 %v155
    %v158 = vpop.xlane.xlu0 %157
    %159 = vadd.xlane.f32.xlu0 %v156
    %v160 = vpop.xlane.xlu0 %159
    %v161 = vld [vmem:[#allocation2] sm:$0x1]
    %v163 = vperm.slane %v161, 0
    %v165 = vadd.f32 %v158, %v163
    %v166 = vadd.f32 %v160, %v163
    %v169 = vrot.slane %v153, 4
    %v170 = vrot.slane %v154, 4
    %v173 = vunpack.c.l.bf16 %v169
    %v174 = vunpack.c.l.bf16 %v170
    %175 = vadd.xlane.f32.xlu0 %v173
    %v176 = vpop.xlane.xlu0 %175
    %177 = vadd.xlane.f32.xlu0 %v174
    %v178 = vpop.xlane.xlu0 %177
    %v179 = vadd.f32 %v176, %v163
    %v180 = vadd.f32 %v178, %v163
    %s181 = smul.u32 0, 16
    %v182 = vlaneseq
    %v183 = vshrl.u32 %v182, 7
    %v184 = vadd.s32 %v183, 8
    %v185 = vstv %s181
    %v186 = vadd.s32 %v185, %v183
    %v187 = vadd.s32 %v185, %v184
    %vm188 = vcmp.lt.s32.totalorder %v186, 8
    %vm189 = vcmp.lt.s32.totalorder %v187, 8
    %v190 = vsel %vm188, %v165, 0.0
    %v191 = vsel %vm189, %v166, 0.0
    %v192 = vsel %vm188, %v179, 0.0
    %v193 = vsel %vm189, %v180, 0.0
    %v194 = vsub.f32 0.0, %v190
    %v195 = vsub.f32 0.0, %v191
    %v196 = vmax.f32 %v194, 0.0
    %v197 = vmax.f32 %v195, 0.0
    %v198 = vand.u32 2147483647, %v194
    %v199 = vand.u32 2147483647, %v195
    %v200 = vsub.f32 0.0, %v198
    %v201 = vsub.f32 0.0, %v199
    %v202 = vmul.f32 %v200, 1.442695
    %v203 = vpow.pop %v202
    %v204 = vmul.f32 %v201, 1.442695
    %v205 = vpow.pop %v204
    %v206 = vadd.f32 %v203, 1.0
    %v207 = vlog2.pop %v206
    %v208 = vmul.f32 %v207, 0.6931472
    %v209 = vmul.f32 -0.5, %v203
    %v210 = vadd.f32 %v209, 1.0
    %v211 = vmul.f32 %v210, %v203
    %v212 = vand.u32 2147483647, %v203
    %vm213 = vcmp.lt.f32.partialorder %v212, 0.0004427343
    %v214 = vsel %vm213, %v211, %v208
    %v215 = vadd.f32 %v205, 1.0
    %v216 = vlog2.pop %v215
    %v217 = vmul.f32 %v216, 0.6931472
    %v218 = vmul.f32 -0.5, %v205
    %v219 = vadd.f32 %v218, 1.0
    %v220 = vmul.f32 %v219, %v205
    %v221 = vand.u32 2147483647, %v205
    %vm222 = vcmp.lt.f32.partialorder %v221, 0.0004427343
    %v223 = vsel %vm222, %v220, %v217
    %v224 = vadd.f32 %v196, %v214
    %v225 = vadd.f32 %v197, %v223
    %v226 = vmax.f32 %v192, 0.0
    %v227 = vmax.f32 %v193, 0.0
    %v228 = vand.u32 2147483647, %v192
    %v229 = vand.u32 2147483647, %v193
    %v230 = vsub.f32 0.0, %v228
    %v231 = vsub.f32 0.0, %v229
    %v232 = vmul.f32 %v230, 1.442695
    %v233 = vpow.pop %v232
    %v234 = vmul.f32 %v231, 1.442695
    %v235 = vpow.pop %v234
    %v236 = vadd.f32 %v233, 1.0
    %v237 = vlog2.pop %v236
    %v238 = vmul.f32 %v237, 0.6931472
    %v239 = vmul.f32 -0.5, %v233
    %v240 = vadd.f32 %v239, 1.0
    %v241 = vmul.f32 %v240, %v233
    %v242 = vand.u32 2147483647, %v233
    %vm243 = vcmp.lt.f32.partialorder %v242, 0.0004427343
    %v244 = vsel %vm243, %v241, %v238
    %v245 = vadd.f32 %v235, 1.0
    %v246 = vlog2.pop %v245
    %v247 = vmul.f32 %v246, 0.6931472
    %v248 = vmul.f32 -0.5, %v235
    %v249 = vadd.f32 %v248, 1.0
    %v250 = vmul.f32 %v249, %v235
    %v251 = vand.u32 2147483647, %v235
    %vm252 = vcmp.lt.f32.partialorder %v251, 0.0004427343
    %v253 = vsel %vm252, %v250, %v247
    %v254 = vadd.f32 %v226, %v244
    %v255 = vadd.f32 %v227, %v253
    %v256 = vadd.f32 %v224, %v254
    %v257 = vadd.f32 %v225, %v255
    %v258 = vsel %vm188, %v256, 0.0
    %v259 = vsel %vm189, %v257, 0.0
    %vm260 = vcmask 7168
    %v261 = vsel %vm260, %v258, 0.0
    %v262 = vsel %vm260, %v259, 0.0
    %v263 = vadd.f32 %v261, %v262
    %v264 = vrot.slane %v263, 4
    %v265 = vadd.f32 %v263, %v264
    %v266 = vrot.slane %v265, 2
    %v267 = vadd.f32 %v265, %v266
    %v268 = vrot.slane %v267, 1
    %v269 = vadd.f32 %v267, %v268
    %vm270 = vcmask 0
    %271 = vst.msk [vmem:[#allocation8] sm:$0x1] %vm270, %v269
    // Predicated region
    $region30: #{tpu_custom_call.1} parent=1 // pred_check
      _
    $region31: #{tpu_custom_call.1} parent=1 // pred_check_branch
      %273 = sbr.rel (0) target = $region33
    $region32: #{tpu_custom_call.1} parent=1 // pred_region
      %275 = vsyncadd [#allocation5], 0
      %s277 = sshll.u32 [#allocation8], 4
      %s278 = int_to_ptr.vmem [resolvable:$true] %s277
      %s279 = sshll.u32 %s5, 4
      %s280 = int_to_ptr.hbm [resolvable:$true] %s279
      %282 = dma.vmem_to_hbm [thread:$0]  %s278, 16, %s280, [#allocation5]
    $region33: #{tpu_custom_call.1} parent=1 // pred_fallthru
      _
    // Predicated region
    $region34: #{tpu_custom_call.1} parent=1 // pred_check
      _
    $region35: #{tpu_custom_call.1} parent=1 // pred_check_branch
      %284 = sbr.rel (0) target = $region37
    $region36: #{tpu_custom_call.1} parent=1 // pred_region
      %286 = dma.done [#allocation5], 16
    $region37: #{tpu_custom_call.1} parent=1 // pred_fallthru
      _
    %287 = vsyncpa [#allocation4], 1
    %288 = vsyncpa [#allocation7], 1
    %289 = vsyncpa [#allocation5], 1

</llo_original>
